<compile_context>
chip_gen: v7x
topology: tpu7x:2x2x1
jax: 0.10.0
libtpu: 0.0.40
codegen_flags: <defaults>
</compile_context>

<pallas_src>
import jax
import jax.numpy as jnp
from jax import lax
from jax.experimental import pallas as pl
from jax.experimental.pallas import tpu as pltpu

# ---- model dims (MLP_dims=(4,16,32), Attention_dims=(4,16,8), FC_dims=(256,64,16))
B = 2            # batch
N = 16           # points per cloud
DIN = 4          # input feature dim
H_MLP = 16       # hidden of F MLP
M = 32           # MLP_dims[-1]
H_ATT = 16       # hidden of attention MLP
A = 8            # Attention_dims[-1]
H_FC = 64        # FC hidden
OUT = 16         # FC_dims[-1]
L1 = H_MLP + H_ATT          # fused layer-1 width  (32)
L2 = M + A                  # fused layer-2 width  (40)
BPAD = max(L1, L2, H_FC, OUT)  # packed-bias row width (64)
assert M * A == 256          # FC_dims[0]


# ---- Pallas kernel (single invocation, everything VMEM-resident) ------------
def _pointnet_attention_pool_kernel(x_ref, wl1_ref, wl2_ref, wf1_ref, wf2_ref,
                                    bias_ref, y_ref):
    x = x_ref[...]                                   # (B*N, DIN)
    bias = bias_ref[...]                             # (4, BPAD) packed biases
    b_l1 = bias[0:1, :L1]                            # [b1 | ba1]   (1, 32)
    b_l2 = bias[1:2, :L2]                            # [b2 | ba2]   (1, 40)
    bf1 = bias[2:3, :H_FC]                           # (1, 64)
    bf2 = bias[3:4, :OUT]                            # (1, 16)

    # fused layer 1 (both branches share the input x): one matmul + one ReLU
    h = jnp.maximum(
        jnp.dot(x, wl1_ref[...], preferred_element_type=jnp.float32) + b_l1, 0.0)   # (B*N, 32)

    # fused layer 2 (block-diagonal weight), doLastRelu=False on both branches
    fz = jnp.dot(h, wl2_ref[...], preferred_element_type=jnp.float32) + b_l2        # (B*N, 40)
    f = fz[:, :M]                                    # (B*N, M)  F-branch features
    s_logits = fz[:, M:]                             # (B*N, A)  attention logits

    # per-batch softmax over points + S^T @ F pooling (B is tiny -> static unroll)
    gf_rows = []
    for b in range(B):
        fb = f[b * N:(b + 1) * N, :]                 # (N, M)
        lb = s_logits[b * N:(b + 1) * N, :]          # (N, A)
        lb = lb - jnp.max(lb, axis=0, keepdims=True)  # softmax over points (dim=-2)
        e = jnp.exp(lb)
        sb = e / jnp.sum(e, axis=0, keepdims=True)   # (N, A)
        gb = lax.dot_general(sb, fb, (((0,), (0,)), ((), ())),
                             preferred_element_type=jnp.float32)   # (A, M) = S^T F
        # row-major flatten (index a*M + m), matching torch G.view(-1, A*M)
        gf_rows.append(jnp.concatenate([gb[a:a + 1, :] for a in range(A)], axis=1))
    gf = jnp.concatenate(gf_rows, axis=0)            # (B, A*M)

    # FC stack: one K=256 matmul, ReLU, final Linear (no last ReLU)
    y1 = jnp.maximum(
        jnp.dot(gf, wf1_ref[...], preferred_element_type=jnp.float32) + bf1, 0.0)   # (B, 64)
    y_ref[...] = jnp.dot(y1, wf2_ref[...], preferred_element_type=jnp.float32) + bf2  # (B, OUT)


# ---- wrapper -----------------------------------------------------------------
def pointnet_attention_pool(x, params):
    """x: (B, N, DIN) float32 -> (B, OUT) float32."""
    bsz, n, din = x.shape
    assert (bsz, n, din) == (B, N, DIN)

    # layout plumbing (wrapper side, traced once under jit):
    w_l1 = jnp.concatenate([params["w1"], params["wa1"]], axis=1)      # (DIN, 32)
    w_l2 = jnp.zeros((L1, L2), jnp.float32)                            # block-diagonal
    w_l2 = w_l2.at[:H_MLP, :M].set(params["w2"])
    w_l2 = w_l2.at[H_MLP:, M:].set(params["wa2"])

    bias = jnp.zeros((4, BPAD), jnp.float32)                           # packed biases
    bias = bias.at[0, :H_MLP].set(params["b1"][0])
    bias = bias.at[0, H_MLP:L1].set(params["ba1"][0])
    bias = bias.at[1, :M].set(params["b2"][0])
    bias = bias.at[1, M:L2].set(params["ba2"][0])
    bias = bias.at[2, :H_FC].set(params["bf1"][0])
    bias = bias.at[3, :OUT].set(params["bf2"][0])

    x2 = x.reshape(bsz * n, din)                                       # pointwise layers are batch-independent

    return pl.pallas_call(
        _pointnet_attention_pool_kernel,
        in_specs=[pl.BlockSpec(memory_space=pltpu.MemorySpace.VMEM)] * 6,
        out_specs=pl.BlockSpec(memory_space=pltpu.MemorySpace.VMEM),
        out_shape=jax.ShapeDtypeStruct((bsz, OUT), jnp.float32),
    )(x2, w_l1, w_l2, params["wf1"], params["wf2"], bias)


# ---- deterministic parameter init (xavier_uniform, relu gain; zero biases) ---
def _xavier(key, din, dout):
    gain = jnp.sqrt(2.0)  # calculate_gain('relu')
    bound = gain * jnp.sqrt(6.0 / (din + dout))
    return jax.random.uniform(key, (din, dout), jnp.float32, -bound, bound)


def make_params(key):
    ks = jax.random.split(key, 6)
    return {
        "w1": _xavier(ks[0], DIN, H_MLP),   "b1": jnp.zeros((1, H_MLP), jnp.float32),
        "w2": _xavier(ks[1], H_MLP, M),     "b2": jnp.zeros((1, M), jnp.float32),
        "wa1": _xavier(ks[2], DIN, H_ATT),  "ba1": jnp.zeros((1, H_ATT), jnp.float32),
        "wa2": _xavier(ks[3], H_ATT, A),    "ba2": jnp.zeros((1, A), jnp.float32),
        "wf1": _xavier(ks[4], A * M, H_FC), "bf1": jnp.zeros((1, H_FC), jnp.float32),
        "wf2": _xavier(ks[5], H_FC, OUT),   "bf2": jnp.zeros((1, OUT), jnp.float32),
    }


# ---- pure-JAX reference ------------------------------------------------------
def reference(x, p):
    h = jax.nn.relu(x @ p["w1"] + p["b1"])
    f = h @ p["w2"] + p["b2"]                                  # (B, N, M)
    ha = jax.nn.relu(x @ p["wa1"] + p["ba1"])
    s = jax.nn.softmax(ha @ p["wa2"] + p["ba2"], axis=-2)      # (B, N, A)
    g = jnp.einsum("bna,bnm->bam", s, f)                       # (B, A, M)
    gf = g.reshape(g.shape[0], -1)                             # (B, A*M) row-major
    y1 = jax.nn.relu(gf @ p["wf1"] + p["bf1"])
    return y1 @ p["wf2"] + p["bf2"]


if __name__ == "__main__":
    key = jax.random.PRNGKey(0)
    kx, kp = jax.random.split(key)
    x = jax.random.normal(kx, (B, N, DIN), jnp.float32)
    params = make_params(kp)

    fn = jax.jit(pointnet_attention_pool)
    y = jax.block_until_ready(fn(x, params))

    y_ref = reference(x, params)
    assert y.shape == (B, OUT)
    assert jnp.allclose(y, y_ref, atol=3e-2, rtol=3e-2), "mismatch vs reference"
    print("KERNEL_OK")
</pallas_src>

<mosaic_0001>
module attributes {stable_mosaic.version = 11 : i64} {
  func.func @_pointnet_attention_pool_kernel(%arg0: memref<32x4xf32, #tpu.memory_space<vmem>>, %arg1: memref<4x32xf32, #tpu.memory_space<vmem>>, %arg2: memref<32x40xf32, #tpu.memory_space<vmem>>, %arg3: memref<256x64xf32, #tpu.memory_space<vmem>>, %arg4: memref<64x16xf32, #tpu.memory_space<vmem>>, %arg5: memref<4x64xf32, #tpu.memory_space<vmem>>, %arg6: memref<2x16xf32, #tpu.memory_space<vmem>>) attributes {dimension_semantics = [], scalar_prefetch = 0 : i64, scratch_operands = 0 : i64, tpu.core_type = #tpu.core_type<tc>} {
    %c0 = arith.constant 0 : index
    %c0_0 = arith.constant 0 : index
    %0 = vector.load %arg0[%c0, %c0_0] : memref<32x4xf32, #tpu.memory_space<vmem>>, vector<32x4xf32>
    %c0_1 = arith.constant 0 : index
    %c0_2 = arith.constant 0 : index
    %1 = vector.load %arg5[%c0_1, %c0_2] : memref<4x64xf32, #tpu.memory_space<vmem>>, vector<4x64xf32>
    %2 = vector.extract_strided_slice %1 {offsets = [0, 0], sizes = [1, 32], strides = [1, 1]} : vector<4x64xf32> to vector<1x32xf32>
    %3 = vector.extract_strided_slice %1 {offsets = [1, 0], sizes = [1, 40], strides = [1, 1]} : vector<4x64xf32> to vector<1x40xf32>
    %4 = vector.extract_strided_slice %1 {offsets = [2, 0], sizes = [1, 64], strides = [1, 1]} : vector<4x64xf32> to vector<1x64xf32>
    %5 = vector.extract_strided_slice %1 {offsets = [3, 0], sizes = [1, 16], strides = [1, 1]} : vector<4x64xf32> to vector<1x16xf32>
    %c0_3 = arith.constant 0 : index
    %c0_4 = arith.constant 0 : index
    %6 = vector.load %arg1[%c0_3, %c0_4] : memref<4x32xf32, #tpu.memory_space<vmem>>, vector<4x32xf32>
    %cst = arith.constant dense<0.000000e+00> : vector<32x32xf32>
    %7 = tpu.matmul %0, %6, %cst {dimension_numbers = #tpu.dot_dimension_numbers<[1], [0], [0], [1], [0, 0, 1, 1], [], []>} : vector<32x4xf32>, vector<4x32xf32>, vector<32x32xf32> -> vector<32x32xf32>
    %8 = vector.broadcast %2 : vector<1x32xf32> to vector<32x32xf32>
    %9 = arith.addf %7, %8 : vector<32x32xf32>
    %cst_5 = arith.constant 0.000000e+00 : f32
    %10 = vector.broadcast %cst_5 : f32 to vector<32x32xf32>
    %11 = arith.maximumf %9, %10 : vector<32x32xf32>
    %c0_6 = arith.constant 0 : index
    %c0_7 = arith.constant 0 : index
    %12 = vector.load %arg2[%c0_6, %c0_7] : memref<32x40xf32, #tpu.memory_space<vmem>>, vector<32x40xf32>
    %cst_8 = arith.constant dense<0.000000e+00> : vector<32x40xf32>
    %13 = tpu.matmul %11, %12, %cst_8 {dimension_numbers = #tpu.dot_dimension_numbers<[1], [0], [0], [1], [0, 0, 1, 1], [], []>} : vector<32x32xf32>, vector<32x40xf32>, vector<32x40xf32> -> vector<32x40xf32>
    %14 = vector.broadcast %3 : vector<1x40xf32> to vector<32x40xf32>
    %15 = arith.addf %13, %14 : vector<32x40xf32>
    %16 = vector.extract_strided_slice %15 {offsets = [0, 0], sizes = [32, 32], strides = [1, 1]} : vector<32x40xf32> to vector<32x32xf32>
    %17 = vector.extract_strided_slice %15 {offsets = [0, 32], sizes = [32, 8], strides = [1, 1]} : vector<32x40xf32> to vector<32x8xf32>
    %18 = vector.extract_strided_slice %16 {offsets = [0, 0], sizes = [16, 32], strides = [1, 1]} : vector<32x32xf32> to vector<16x32xf32>
    %19 = vector.extract_strided_slice %17 {offsets = [0, 0], sizes = [16, 8], strides = [1, 1]} : vector<32x8xf32> to vector<16x8xf32>
    %cst_9 = arith.constant dense<0xFF800000> : vector<8xf32>
    %20 = vector.multi_reduction <maximumf>, %19, %cst_9 [0] : vector<16x8xf32> to vector<8xf32>
    %21 = vector.shape_cast %20 : vector<8xf32> to vector<1x8xf32>
    %22 = vector.broadcast %21 : vector<1x8xf32> to vector<16x8xf32>
    %23 = arith.subf %19, %22 : vector<16x8xf32>
    %24 = math.exp %23 : vector<16x8xf32>
    %cst_10 = arith.constant dense<0.000000e+00> : vector<8xf32>
    %25 = vector.multi_reduction <add>, %24, %cst_10 [0] : vector<16x8xf32> to vector<8xf32>
    %26 = vector.shape_cast %25 : vector<8xf32> to vector<1x8xf32>
    %27 = vector.broadcast %26 : vector<1x8xf32> to vector<16x8xf32>
    %28 = arith.divf %24, %27 : vector<16x8xf32>
    %cst_11 = arith.constant dense<0.000000e+00> : vector<8x32xf32>
    %29 = tpu.matmul %28, %18, %cst_11 {dimension_numbers = #tpu.dot_dimension_numbers<[0], [0], [1], [1], [0, 1, 1, 1], [], []>} : vector<16x8xf32>, vector<16x32xf32>, vector<8x32xf32> -> vector<8x32xf32>
    %30 = vector.extract_strided_slice %29 {offsets = [0, 0], sizes = [1, 32], strides = [1, 1]} : vector<8x32xf32> to vector<1x32xf32>
    %31 = vector.extract_strided_slice %29 {offsets = [1, 0], sizes = [1, 32], strides = [1, 1]} : vector<8x32xf32> to vector<1x32xf32>
    %32 = vector.extract_strided_slice %29 {offsets = [2, 0], sizes = [1, 32], strides = [1, 1]} : vector<8x32xf32> to vector<1x32xf32>
    %33 = vector.extract_strided_slice %29 {offsets = [3, 0], sizes = [1, 32], strides = [1, 1]} : vector<8x32xf32> to vector<1x32xf32>
    %34 = vector.extract_strided_slice %29 {offsets = [4, 0], sizes = [1, 32], strides = [1, 1]} : vector<8x32xf32> to vector<1x32xf32>
    %35 = vector.extract_strided_slice %29 {offsets = [5, 0], sizes = [1, 32], strides = [1, 1]} : vector<8x32xf32> to vector<1x32xf32>
    %36 = vector.extract_strided_slice %29 {offsets = [6, 0], sizes = [1, 32], strides = [1, 1]} : vector<8x32xf32> to vector<1x32xf32>
    %37 = vector.extract_strided_slice %29 {offsets = [7, 0], sizes = [1, 32], strides = [1, 1]} : vector<8x32xf32> to vector<1x32xf32>
    %38 = tpu.concatenate %30, %31, %32, %33, %34, %35, %36, %37 in 1 : vector<1x32xf32>, vector<1x32xf32>, vector<1x32xf32>, vector<1x32xf32>, vector<1x32xf32>, vector<1x32xf32>, vector<1x32xf32>, vector<1x32xf32> -> vector<1x256xf32>
    %39 = vector.extract_strided_slice %16 {offsets = [16, 0], sizes = [16, 32], strides = [1, 1]} : vector<32x32xf32> to vector<16x32xf32>
    %40 = vector.extract_strided_slice %17 {offsets = [16, 0], sizes = [16, 8], strides = [1, 1]} : vector<32x8xf32> to vector<16x8xf32>
    %cst_12 = arith.constant dense<0xFF800000> : vector<8xf32>
    %41 = vector.multi_reduction <maximumf>, %40, %cst_12 [0] : vector<16x8xf32> to vector<8xf32>
    %42 = vector.shape_cast %41 : vector<8xf32> to vector<1x8xf32>
    %43 = vector.broadcast %42 : vector<1x8xf32> to vector<16x8xf32>
    %44 = arith.subf %40, %43 : vector<16x8xf32>
    %45 = math.exp %44 : vector<16x8xf32>
    %cst_13 = arith.constant dense<0.000000e+00> : vector<8xf32>
    %46 = vector.multi_reduction <add>, %45, %cst_13 [0] : vector<16x8xf32> to vector<8xf32>
    %47 = vector.shape_cast %46 : vector<8xf32> to vector<1x8xf32>
    %48 = vector.broadcast %47 : vector<1x8xf32> to vector<16x8xf32>
    %49 = arith.divf %45, %48 : vector<16x8xf32>
    %cst_14 = arith.constant dense<0.000000e+00> : vector<8x32xf32>
    %50 = tpu.matmul %49, %39, %cst_14 {dimension_numbers = #tpu.dot_dimension_numbers<[0], [0], [1], [1], [0, 1, 1, 1], [], []>} : vector<16x8xf32>, vector<16x32xf32>, vector<8x32xf32> -> vector<8x32xf32>
    %51 = vector.extract_strided_slice %50 {offsets = [0, 0], sizes = [1, 32], strides = [1, 1]} : vector<8x32xf32> to vector<1x32xf32>
    %52 = vector.extract_strided_slice %50 {offsets = [1, 0], sizes = [1, 32], strides = [1, 1]} : vector<8x32xf32> to vector<1x32xf32>
    %53 = vector.extract_strided_slice %50 {offsets = [2, 0], sizes = [1, 32], strides = [1, 1]} : vector<8x32xf32> to vector<1x32xf32>
    %54 = vector.extract_strided_slice %50 {offsets = [3, 0], sizes = [1, 32], strides = [1, 1]} : vector<8x32xf32> to vector<1x32xf32>
    %55 = vector.extract_strided_slice %50 {offsets = [4, 0], sizes = [1, 32], strides = [1, 1]} : vector<8x32xf32> to vector<1x32xf32>
    %56 = vector.extract_strided_slice %50 {offsets = [5, 0], sizes = [1, 32], strides = [1, 1]} : vector<8x32xf32> to vector<1x32xf32>
    %57 = vector.extract_strided_slice %50 {offsets = [6, 0], sizes = [1, 32], strides = [1, 1]} : vector<8x32xf32> to vector<1x32xf32>
    %58 = vector.extract_strided_slice %50 {offsets = [7, 0], sizes = [1, 32], strides = [1, 1]} : vector<8x32xf32> to vector<1x32xf32>
    %59 = tpu.concatenate %51, %52, %53, %54, %55, %56, %57, %58 in 1 : vector<1x32xf32>, vector<1x32xf32>, vector<1x32xf32>, vector<1x32xf32>, vector<1x32xf32>, vector<1x32xf32>, vector<1x32xf32>, vector<1x32xf32> -> vector<1x256xf32>
    %60 = tpu.concatenate %38, %59 in 0 : vector<1x256xf32>, vector<1x256xf32> -> vector<2x256xf32>
    %c0_15 = arith.constant 0 : index
    %c0_16 = arith.constant 0 : index
    %61 = vector.load %arg3[%c0_15, %c0_16] : memref<256x64xf32, #tpu.memory_space<vmem>>, vector<256x64xf32>
    %cst_17 = arith.constant dense<0.000000e+00> : vector<2x64xf32>
    %62 = tpu.matmul %60, %61, %cst_17 {dimension_numbers = #tpu.dot_dimension_numbers<[1], [0], [0], [1], [0, 0, 1, 1], [], []>} : vector<2x256xf32>, vector<256x64xf32>, vector<2x64xf32> -> vector<2x64xf32>
    %63 = vector.broadcast %4 : vector<1x64xf32> to vector<2x64xf32>
    %64 = arith.addf %62, %63 : vector<2x64xf32>
    %cst_18 = arith.constant 0.000000e+00 : f32
    %65 = vector.broadcast %cst_18 : f32 to vector<2x64xf32>
    %66 = arith.maximumf %64, %65 : vector<2x64xf32>
    %c0_19 = arith.constant 0 : index
    %c0_20 = arith.constant 0 : index
    %67 = vector.load %arg4[%c0_19, %c0_20] : memref<64x16xf32, #tpu.memory_space<vmem>>, vector<64x16xf32>
    %cst_21 = arith.constant dense<0.000000e+00> : vector<2x16xf32>
    %68 = tpu.matmul %66, %67, %cst_21 {dimension_numbers = #tpu.dot_dimension_numbers<[1], [0], [0], [1], [0, 0, 1, 1], [], []>} : vector<2x64xf32>, vector<64x16xf32>, vector<2x16xf32> -> vector<2x16xf32>
    %69 = vector.broadcast %5 : vector<1x16xf32> to vector<2x16xf32>
    %70 = arith.addf %68, %69 : vector<2x16xf32>
    %c0_22 = arith.constant 0 : index
    %c0_23 = arith.constant 0 : index
    %71 = vector.load %arg6[%c0_22, %c0_23] : memref<2x16xf32, #tpu.memory_space<vmem>>, vector<2x16xf32>
    tpu.vector_store %arg6[%c0_22, %c0_23], %70 {strides = array<i32>} : memref<2x16xf32, #tpu.memory_space<vmem>>, vector<2x16xf32>,
    return
  }
}

</mosaic_0001>

<llo_original>
// kernel: pointnet_attention_pool.1
$region0: #{pointnet_attention_pool.1}
  #allocation0 [shape = 'u32[]', space=smem, size = 0x4, offset = 0x4, fixed_abs, tag = 'smem constant byte address 0x4 - core index']
  #allocation1 [shape = 'u32[144,128]{1,0:T(1,128)}', space=vmem, size = 0x12000, scoped, tag = 'internal scratch']
  %s0 = inlined_call_operand.vmem [shape: f32[32,4], index: 0, kind: input, shape index: {}]
  %s1 = inlined_call_operand.vmem [shape: f32[4,32], index: 1, kind: input, shape index: {}]
  %s2 = inlined_call_operand.vmem [shape: f32[32,40], index: 2, kind: input, shape index: {}]
  %s3 = inlined_call_operand.vmem [shape: f32[256,64], index: 3, kind: input, shape index: {}]
  %s4 = inlined_call_operand.vmem [shape: f32[64,16], index: 4, kind: input, shape index: {}]
  %s5 = inlined_call_operand.vmem [shape: f32[4,64], index: 5, kind: input, shape index: {}]
  %s6 = inlined_call_operand.hbm [shape: f32[2,16], index: 6, kind: output, shape index: {}]
  %s7 = sld [smem:[#allocation0]]
  $region34: #{pointnet_attention_pool.1} parent=0
    _
  %s9 = ssub.s32 1, %s7
  %s10 = scalar_select 0, %s9, %s7
  $region1: #{pointnet_attention_pool.1} parent=0
    #allocation2 [shape = 'u8[1024]{0}', space=vmem, size = 0x400, scoped, tag = 'output window, operand 0, single buffered']
    #allocation3 [shape = 's32[1]{0}', space=sflag, size = 0x4, scoped, tag = 'scoped memory for pointnet_attention_pool.1']
    %11 = vsyncpa [#allocation3], 0
    // Predicated region
    $region2: #{pointnet_attention_pool.1} parent=1 // pred_check
      _
    $region3: #{pointnet_attention_pool.1} parent=1 // pred_check_branch
      %13 = sbr.rel (0) target = $region5
    $region4: #{pointnet_attention_pool.1} parent=1 // pred_region
      _
    $region5: #{pointnet_attention_pool.1} parent=1 // pred_fallthru
      _
    // Predicated region
    $region6: #{pointnet_attention_pool.1} parent=1 // pred_check
      _
    $region7: #{pointnet_attention_pool.1} parent=1 // pred_check_branch
      %15 = sbr.rel (0) target = $region9
    $region8: #{pointnet_attention_pool.1} parent=1 // pred_region
      _
    $region9: #{pointnet_attention_pool.1} parent=1 // pred_fallthru
      _
    // Predicated region
    $region10: #{pointnet_attention_pool.1} parent=1 // pred_check
      _
    $region11: #{pointnet_attention_pool.1} parent=1 // pred_check_branch
      %17 = sbr.rel (0) target = $region13
    $region12: #{pointnet_attention_pool.1} parent=1 // pred_region
      _
    $region13: #{pointnet_attention_pool.1} parent=1 // pred_fallthru
      _
    // Predicated region
    $region14: #{pointnet_attention_pool.1} parent=1 // pred_check
      _
    $region15: #{pointnet_attention_pool.1} parent=1 // pred_check_branch
      %19 = sbr.rel (0) target = $region17
    $region16: #{pointnet_attention_pool.1} parent=1 // pred_region
      _
    $region17: #{pointnet_attention_pool.1} parent=1 // pred_fallthru
      _
    // Predicated region
    $region18: #{pointnet_attention_pool.1} parent=1 // pred_check
      _
    $region19: #{pointnet_attention_pool.1} parent=1 // pred_check_branch
      %21 = sbr.rel (0) target = $region21
    $region20: #{pointnet_attention_pool.1} parent=1 // pred_region
      _
    $region21: #{pointnet_attention_pool.1} parent=1 // pred_fallthru
      _
    // Predicated region
    $region22: #{pointnet_attention_pool.1} parent=1 // pred_check
      _
    $region23: #{pointnet_attention_pool.1} parent=1 // pred_check_branch
      %23 = sbr.rel (0) target = $region25
    $region24: #{pointnet_attention_pool.1} parent=1 // pred_region
      _
    $region25: #{pointnet_attention_pool.1} parent=1 // pred_fallthru
      _
    %v24 = vld [vmem:[%s0] sm:$0xff]
    %v25 = vld [vmem:[%s0 + $0x8] sm:$0xff]
    %v26 = vld [vmem:[%s0 + $0x10] sm:$0xff]
    %v27 = vld [vmem:[%s0 + $0x18] sm:$0xff]
    %v28 = vld [vmem:[%s5] sm:$0xf]
    %v29 = vld [vmem:[%s1] sm:$0xf]
    %v30 = vlaneseq
    %v31 = vshrl.u32 %v30, 7
    %v32 = vsub.s32 0, %v31
    %v33 = vrot.slane %v28, %v32
    %vm34 = vcmask 31744
    %v36 = vsel %vm34, %v24, 0
    %v39 = vsel %vm34, %v25, 0
    %v42 = vsel %vm34, %v26, 0
    %v45 = vsel %vm34, %v27, 0
    %vm47 = vcmask 1043456
    %v49 = vsel %vm47, %v29, 0
    %51 = vmatprep.subr.mxu0 0.0
    %52 = vmatpush1.msra.mxu0 %v49
    %53 = vmatprep.subr.mxu0 0.0
    %54 = vmatpush1.msra.mxu0 0.0
    %55 = vmatprep.subr.mxu0 0.0
    %56 = vmatpush1.msra.mxu0 0.0
    %57 = vmatprep.subr.mxu0 0.0
    %58 = vmatpush1.msra.mxu0 0.0
    %59 = vmatprep.subr.mxu0 0.0
    %60 = vmatpush1.msra.mxu0 0.0
    %61 = vmatprep.subr.mxu0 0.0
    %62 = vmatpush1.msra.mxu0 0.0
    %63 = vmatprep.subr.mxu0 0.0
    %64 = vmatpush1.msra.mxu0 0.0
    %65 = vmatprep.subr.mxu0 0.0
    %66 = vmatpush1.msra.mxu0 0.0
    %67 = vmatprep.subr.mxu0 0.0
    %68 = vmatpush1.msra.mxu0 0.0
    %69 = vmatprep.subr.mxu0 0.0
    %70 = vmatpush1.msra.mxu0 0.0
    %71 = vmatprep.subr.mxu0 0.0
    %72 = vmatpush1.msra.mxu0 0.0
    %73 = vmatprep.subr.mxu0 0.0
    %74 = vmatpush1.msra.mxu0 0.0
    %75 = vmatprep.subr.mxu0 0.0
    %76 = vmatpush1.msra.mxu0 0.0
    %77 = vmatprep.subr.mxu0 0.0
    %78 = vmatpush1.msra.mxu0 0.0
    %79 = vmatprep.subr.mxu0 0.0
    %80 = vmatpush1.msra.mxu0 0.0
    %81 = vmatprep.subr.mxu0 0.0
    %82 = vmatpush1.msra.mxu0 0.0
    %83 = vmatprep.subr.mxu0 0.0
    %84 = vmatpush1.msra.mxu0 0.0
    %85 = vmatprep.subr.mxu0 0.0
    %86 = vmatpush1.msra.mxu0 0.0
    %87 = vmatprep.subr.mxu0 0.0
    %88 = vmatpush1.msra.mxu0 0.0
    %89 = vmatprep.subr.mxu0 0.0
    %90 = vmatpush1.msra.mxu0 0.0
    %91 = vmatprep.subr.mxu0 0.0
    %92 = vmatpush1.msra.mxu0 0.0
    %93 = vmatprep.subr.mxu0 0.0
    %94 = vmatpush1.msra.mxu0 0.0
    %95 = vmatprep.subr.mxu0 0.0
    %96 = vmatpush1.msra.mxu0 0.0
    %97 = vmatprep.subr.mxu0 0.0
    %98 = vmatpush1.msra.mxu0 0.0
    %99 = vmatprep.subr.mxu0 0.0
    %100 = vmatpush1.msra.mxu0 0.0
    %101 = vmatprep.subr.mxu0 0.0
    %102 = vmatpush1.msra.mxu0 0.0
    %103 = vmatprep.subr.mxu0 0.0
    %104 = vmatpush1.msra.mxu0 0.0
    %105 = vmatprep.subr.mxu0 0.0
    %106 = vmatpush1.msra.mxu0 0.0
    %107 = vmatprep.subr.mxu0 0.0
    %108 = vmatpush1.msra.mxu0 0.0
    %109 = vmatprep.subr.mxu0 0.0
    %110 = vmatpush1.msra.mxu0 0.0
    %111 = vmatprep.subr.mxu0 0.0
    %112 = vmatpush1.msra.mxu0 0.0
    %113 = vmatprep.subr.mxu0 0.0
    %114 = vmatpush1.msra.mxu0 0.0
    %115 = vmatprep.mubr.f32.mxu0 0.0
    %116 = vmatmul.mubr.f32.gmra.mrb[0].mxu0 %v36
    %v117 = vpop.f32.mrb[0].mxu0
    %v118 = vadd.f32 %v33, %v117
    %v119 = vpop.f32.mrb[0].mxu0
    %120 = vmatprep.mubr.f32.mxu0 0.0
    %121 = vmatmul.mubr.f32.gmra.mrb[0].mxu0 %v39
    %v122 = vpop.f32.mrb[0].mxu0
    %v123 = vadd.f32 %v33, %v122
    %v124 = vpop.f32.mrb[0].mxu0
    %125 = vmatprep.mubr.f32.mxu0 0.0
    %126 = vmatmul.mubr.f32.gmra.mrb[0].mxu0 %v42
    %v127 = vpop.f32.mrb[0].mxu0
    %v128 = vadd.f32 %v33, %v127
    %v129 = vpop.f32.mrb[0].mxu0
    %130 = vmatprep.mubr.f32.mxu0 0.0
    %131 = vmatmul.mubr.f32.gmra.mrb[0].mxu0 %v45
    %v132 = vpop.f32.mrb[0].mxu0
    %v133 = vadd.f32 %v33, %v132
    %v134 = vpop.f32.mrb[0].mxu0
    %135 = vdwg.mxu0
    %v136 = vmax.f32 %v118, 0.0
    %v137 = vmax.f32 %v123, 0.0
    %v138 = vmax.f32 %v128, 0.0
    %v139 = vmax.f32 %v133, 0.0
    %v140 = vld [vmem:[%s2] sm:$0xff]
    %v141 = vld [vmem:[%s2 + $0x8] sm:$0xff]
    %v142 = vld [vmem:[%s2 + $0x10] sm:$0xff]
    %v143 = vld [vmem:[%s2 + $0x18] sm:$0xff]
    %v144 = vlaneseq
    %v145 = vshrl.u32 %v144, 7
    %v146 = vsub.s32 1, %v145
    %v147 = vrot.slane %v28, %v146
    %vm148 = vcmask 261120
    %v150 = vsel %vm148, %v136, 0
    %v153 = vsel %vm148, %v137, 0
    %v156 = vsel %vm148, %v138, 0
    %v159 = vsel %vm148, %v139, 0
    %161 = vmatprep.subr.mxu0 0.0
    %162 = vmatpush1.msra.mxu0 %v140
    %163 = vmatprep.subr.mxu0 0.0
    %164 = vmatpush1.msra.mxu0 %v141
    %165 = vmatprep.subr.mxu0 0.0
    %166 = vmatpush1.msra.mxu0 %v142
    %167 = vmatprep.subr.mxu0 0.0
    %168 = vmatpush1.msra.mxu0 %v143
    %169 = vmatprep.subr.mxu0 0.0
    %170 = vmatpush1.msra.mxu0 0.0
    %171 = vmatprep.subr.mxu0 0.0
    %172 = vmatpush1.msra.mxu0 0.0
    %173 = vmatprep.subr.mxu0 0.0
    %174 = vmatpush1.msra.mxu0 0.0
    %175 = vmatprep.subr.mxu0 0.0
    %176 = vmatpush1.msra.mxu0 0.0
    %177 = vmatprep.subr.mxu0 0.0
    %178 = vmatpush1.msra.mxu0 0.0
    %179 = vmatprep.subr.mxu0 0.0
    %180 = vmatpush1.msra.mxu0 0.0
    %181 = vmatprep.subr.mxu0 0.0
    %182 = vmatpush1.msra.mxu0 0.0
    %183 = vmatprep.subr.mxu0 0.0
    %184 = vmatpush1.msra.mxu0 0.0
    %185 = vmatprep.subr.mxu0 0.0
    %186 = vmatpush1.msra.mxu0 0.0
    %187 = vmatprep.subr.mxu0 0.0
    %188 = vmatpush1.msra.mxu0 0.0
    %189 = vmatprep.subr.mxu0 0.0
    %190 = vmatpush1.msra.mxu0 0.0
    %191 = vmatprep.subr.mxu0 0.0
    %192 = vmatpush1.msra.mxu0 0.0
    %193 = vmatprep.subr.mxu0 0.0
    %194 = vmatpush1.msra.mxu0 0.0
    %195 = vmatprep.subr.mxu0 0.0
    %196 = vmatpush1.msra.mxu0 0.0
    %197 = vmatprep.subr.mxu0 0.0
    %198 = vmatpush1.msra.mxu0 0.0
    %199 = vmatprep.subr.mxu0 0.0
    %200 = vmatpush1.msra.mxu0 0.0
    %201 = vmatprep.subr.mxu0 0.0
    %202 = vmatpush1.msra.mxu0 0.0
    %203 = vmatprep.subr.mxu0 0.0
    %204 = vmatpush1.msra.mxu0 0.0
    %205 = vmatprep.subr.mxu0 0.0
    %206 = vmatpush1.msra.mxu0 0.0
    %207 = vmatprep.subr.mxu0 0.0
    %208 = vmatpush1.msra.mxu0 0.0
    %209 = vmatprep.subr.mxu0 0.0
    %210 = vmatpush1.msra.mxu0 0.0
    %211 = vmatprep.subr.mxu0 0.0
    %212 = vmatpush1.msra.mxu0 0.0
    %213 = vmatprep.subr.mxu0 0.0
    %214 = vmatpush1.msra.mxu0 0.0
    %215 = vmatprep.subr.mxu0 0.0
    %216 = vmatpush1.msra.mxu0 0.0
    %217 = vmatprep.subr.mxu0 0.0
    %218 = vmatpush1.msra.mxu0 0.0
    %219 = vmatprep.subr.mxu0 0.0
    %220 = vmatpush1.msra.mxu0 0.0
    %221 = vmatprep.subr.mxu0 0.0
    %222 = vmatpush1.msra.mxu0 0.0
    %223 = vmatprep.subr.mxu0 0.0
    %224 = vmatpush1.msra.mxu0 0.0
    %225 = vmatprep.mubr.f32.mxu0 0.0
    %226 = vmatmul.mubr.f32.gmra.mrb[0].mxu0 %v150
    %v227 = vpop.f32.mrb[0].mxu0
    %v228 = vadd.f32 %v147, %v227
    %v229 = vpop.f32.mrb[0].mxu0
    %230 = vmatprep.mubr.f32.mxu0 0.0
    %231 = vmatmul.mubr.f32.gmra.mrb[0].mxu0 %v153
    %v232 = vpop.f32.mrb[0].mxu0
    %v233 = vadd.f32 %v147, %v232
    %v234 = vpop.f32.mrb[0].mxu0
    %235 = vmatprep.mubr.f32.mxu0 0.0
    %236 = vmatmul.mubr.f32.gmra.mrb[0].mxu0 %v156
    %v237 = vpop.f32.mrb[0].mxu0
    %v238 = vadd.f32 %v147, %v237
    %v239 = vpop.f32.mrb[0].mxu0
    %240 = vmatprep.mubr.f32.mxu0 0.0
    %241 = vmatmul.mubr.f32.gmra.mrb[0].mxu0 %v159
    %v242 = vpop.f32.mrb[0].mxu0
    %v243 = vadd.f32 %v147, %v242
    %v244 = vpop.f32.mrb[0].mxu0
    %245 = vdwg.mxu0
    %vm246 = vcmask 326912
    %v247 = vsel %vm246, %v228, -inf
    %v248 = vsel %vm246, %v233, -inf
    %v249 = vmax.f32 %v247, %v248
    %v250 = vrot.slane %v249, 4
    %v251 = vmax.f32 %v249, %v250
    %v252 = vrot.slane %v251, 2
    %v253 = vmax.f32 %v251, %v252
    %v254 = vrot.slane %v253, 1
    %v255 = vmax.f32 %v253, %v254
    %v256 = vsub.f32 %v228, %v255
    %v257 = vsub.f32 %v233, %v255
    %v258 = vmul.f32 %v256, 1.442695
    %v259 = vpow.pop %v258
    %v260 = vmul.f32 %v257, 1.442695
    %v261 = vpow.pop %v260
    %v262 = vsel %vm246, %v259, 0.0
    %v263 = vsel %vm246, %v261, 0.0
    %v264 = vadd.f32 %v262, %v263
    %v265 = vrot.slane %v264, 4
    %v266 = vadd.f32 %v264, %v265
    %v267 = vrot.slane %v266, 2
    %v268 = vadd.f32 %v266, %v267
    %v269 = vrot.slane %v268, 1
    %v270 = vadd.f32 %v268, %v269
    %v271 = vrcp.pop %v270
    %v272 = vmul.f32 %v259, %v271
    %v273 = vmul.f32 %v261, %v271
    %276 = vrot.lane.b32.xlu0 %v272, 96
    %v277 = vpop.permute.xlu0 %276
    %278 = vrot.lane.b32.xlu0 %v273, 96
    %v279 = vpop.permute.xlu0 %278
    %282 = vxpose.xlu0.b32.start [1/16] %v277, 128
    %283 = vxpose.xlu0.b32.cont [2/16] %v279, 128
    %284 = vxpose.xlu0.b32.cont [3/16] 0.0, 128
    %285 = vxpose.xlu0.b32.cont [4/16] 0.0, 128
    %286 = vxpose.xlu0.b32.cont [5/16] 0.0, 128
    %287 = vxpose.xlu0.b32.cont [6/16] 0.0, 128
    %288 = vxpose.xlu0.b32.cont [7/16] 0.0, 128
    %289 = vxpose.xlu0.b32.cont [8/16] 0.0, 128
    %290 = vxpose.xlu0.b32.cont [9/16] 0.0, 128
    %291 = vxpose.xlu0.b32.cont [10/16] 0.0, 128
    %292 = vxpose.xlu0.b32.cont [11/16] 0.0, 128
    %293 = vxpose.xlu0.b32.cont [12/16] 0.0, 128
    %294 = vxpose.xlu0.b32.cont [13/16] 0.0, 128
    %295 = vxpose.xlu0.b32.cont [14/16] 0.0, 128
    %296 = vxpose.xlu0.b32.cont [15/16] 0.0, 128
    %297 = vxpose.xlu0.b32.end [16/16] 0.0, 128
    %v298 = vpop.trf.xlu0
    %v299 = vpop.trf.xlu0
    %v300 = vpop.trf.xlu0
    %v301 = vpop.trf.xlu0
    %v302 = vpop.trf.xlu0
    %v303 = vpop.trf.xlu0
    %v304 = vpop.trf.xlu0
    %v305 = vpop.trf.xlu0
    %v306 = vpop.trf.xlu0
    %v307 = vpop.trf.xlu0
    %v308 = vpop.trf.xlu0
    %v309 = vpop.trf.xlu0
    %v310 = vpop.trf.xlu0
    %v311 = vpop.trf.xlu0
    %v312 = vpop.trf.xlu0
    %v313 = vpop.trf.xlu0
    %vm314 = vcmask 130048
    %v316 = vsel %vm314, %v298, 0
    %318 = vmatprep.subr.mxu0 0.0
    %319 = vmatpush1.msra.mxu0 %v228
    %320 = vmatprep.subr.mxu0 0.0
    %321 = vmatpush1.msra.mxu0 %v233
    %322 = vmatprep.subr.mxu0 0.0
    %323 = vmatpush1.msra.mxu0 0.0
    %324 = vmatprep.subr.mxu0 0.0
    %325 = vmatpush1.msra.mxu0 0.0
    %326 = vmatprep.subr.mxu0 0.0
    %327 = vmatpush1.msra.mxu0 0.0
    %328 = vmatprep.subr.mxu0 0.0
    %329 = vmatpush1.msra.mxu0 0.0
    %330 = vmatprep.subr.mxu0 0.0
    %331 = vmatpush1.msra.mxu0 0.0
    %332 = vmatprep.subr.mxu0 0.0
    %333 = vmatpush1.msra.mxu0 0.0
    %334 = vmatprep.subr.mxu0 0.0
    %335 = vmatpush1.msra.mxu0 0.0
    %336 = vmatprep.subr.mxu0 0.0
    %337 = vmatpush1.msra.mxu0 0.0
    %338 = vmatprep.subr.mxu0 0.0
    %339 = vmatpush1.msra.mxu0 0.0
    %340 = vmatprep.subr.mxu0 0.0
    %341 = vmatpush1.msra.mxu0 0.0
    %342 = vmatprep.subr.mxu0 0.0
    %343 = vmatpush1.msra.mxu0 0.0
    %344 = vmatprep.subr.mxu0 0.0
    %345 = vmatpush1.msra.mxu0 0.0
    %346 = vmatprep.subr.mxu0 0.0
    %347 = vmatpush1.msra.mxu0 0.0
    %348 = vmatprep.subr.mxu0 0.0
    %349 = vmatpush1.msra.mxu0 0.0
    %350 = vmatprep.subr.mxu0 0.0
    %351 = vmatpush1.msra.mxu0 0.0
    %352 = vmatprep.subr.mxu0 0.0
    %353 = vmatpush1.msra.mxu0 0.0
    %354 = vmatprep.subr.mxu0 0.0
    %355 = vmatpush1.msra.mxu0 0.0
    %356 = vmatprep.subr.mxu0 0.0
    %357 = vmatpush1.msra.mxu0 0.0
    %358 = vmatprep.subr.mxu0 0.0
    %359 = vmatpush1.msra.mxu0 0.0
    %360 = vmatprep.subr.mxu0 0.0
    %361 = vmatpush1.msra.mxu0 0.0
    %362 = vmatprep.subr.mxu0 0.0
    %363 = vmatpush1.msra.mxu0 0.0
    %364 = vmatprep.subr.mxu0 0.0
    %365 = vmatpush1.msra.mxu0 0.0
    %366 = vmatprep.subr.mxu0 0.0
    %367 = vmatpush1.msra.mxu0 0.0
    %368 = vmatprep.subr.mxu0 0.0
    %369 = vmatpush1.msra.mxu0 0.0
    %370 = vmatprep.subr.mxu0 0.0
    %371 = vmatpush1.msra.mxu0 0.0
    %372 = vmatprep.subr.mxu0 0.0
    %373 = vmatpush1.msra.mxu0 0.0
    %374 = vmatprep.subr.mxu0 0.0
    %375 = vmatpush1.msra.mxu0 0.0
    %376 = vmatprep.subr.mxu0 0.0
    %377 = vmatpush1.msra.mxu0 0.0
    %378 = vmatprep.subr.mxu0 0.0
    %379 = vmatpush1.msra.mxu0 0.0
    %380 = vmatprep.subr.mxu0 0.0
    %381 = vmatpush1.msra.mxu0 0.0
    %382 = vmatprep.mubr.f32.mxu0 0.0
    %383 = vmatmul.mubr.f32.gmra.mrb[0].mxu0 %v316
    %v384 = vpop.f32.mrb[0].mxu0
    %v385 = vadd.f32 0.0, %v384
    %v386 = vpop.f32.mrb[0].mxu0
    %387 = vdwg.mxu0
    %v389 = vrot.slane %v385, 1
    %390 = vrot.lane.b32.xlu0 %v389, 32
    %v391 = vpop.permute.xlu0 %390
    %v393 = vrot.slane %v385, 2
    %394 = vrot.lane.b32.xlu0 %v393, 64
    %v395 = vpop.permute.xlu0 %394
    %v397 = vrot.slane %v385, 3
    %398 = vrot.lane.b32.xlu0 %v397, 96
    %v399 = vpop.permute.xlu0 %398
    %v401 = vrot.slane %v385, 4
    %v403 = vrot.slane %v385, 5
    %404 = vrot.lane.b32.xlu0 %v403, 32
    %v405 = vpop.permute.xlu0 %404
    %v407 = vrot.slane %v385, 6
    %408 = vrot.lane.b32.xlu0 %v407, 64
    %v409 = vpop.permute.xlu0 %408
    %v411 = vrot.slane %v385, 7
    %412 = vrot.lane.b32.xlu0 %v411, 96
    %v413 = vpop.permute.xlu0 %412
    %v415 = vsel %vm148, %v385, %v391
    %vm416 = vcmask 523264
    %v417 = vsel %vm416, %v415, %v395
    %vm418 = vcmask 785408
    %v419 = vsel %vm418, %v417, %v399
    %v420 = vsel %vm148, %v401, %v405
    %v421 = vsel %vm416, %v420, %v409
    %v422 = vsel %vm418, %v421, %v413
    %v423 = vsel %vm246, %v238, -inf
    %v424 = vsel %vm246, %v243, -inf
    %v425 = vmax.f32 %v423, %v424
    %v426 = vrot.slane %v425, 4
    %v427 = vmax.f32 %v425, %v426
    %v428 = vrot.slane %v427, 2
    %v429 = vmax.f32 %v427, %v428
    %v430 = vrot.slane %v429, 1
    %v431 = vmax.f32 %v429, %v430
    %v432 = vsub.f32 %v238, %v431
    %v433 = vsub.f32 %v243, %v431
    %v434 = vmul.f32 %v432, 1.442695
    %v435 = vpow.pop %v434
    %v436 = vmul.f32 %v433, 1.442695
    %v437 = vpow.pop %v436
    %v438 = vsel %vm246, %v435, 0.0
    %v439 = vsel %vm246, %v437, 0.0
    %v440 = vadd.f32 %v438, %v439
    %v441 = vrot.slane %v440, 4
    %v442 = vadd.f32 %v440, %v441
    %v443 = vrot.slane %v442, 2
    %v444 = vadd.f32 %v442, %v443
    %v445 = vrot.slane %v444, 1
    %v446 = vadd.f32 %v444, %v445
    %v447 = vrcp.pop %v446
    %v448 = vmul.f32 %v435, %v447
    %v449 = vmul.f32 %v437, %v447
    %452 = vrot.lane.b32.xlu0 %v448, 96
    %v453 = vpop.permute.xlu0 %452
    %454 = vrot.lane.b32.xlu0 %v449, 96
    %v455 = vpop.permute.xlu0 %454
    %458 = vxpose.xlu0.b32.start [1/16] %v453, 128
    %459 = vxpose.xlu0.b32.cont [2/16] %v455, 128
    %460 = vxpose.xlu0.b32.cont [3/16] 0.0, 128
    %461 = vxpose.xlu0.b32.cont [4/16] 0.0, 128
    %462 = vxpose.xlu0.b32.cont [5/16] 0.0, 128
    %463 = vxpose.xlu0.b32.cont [6/16] 0.0, 128
    %464 = vxpose.xlu0.b32.cont [7/16] 0.0, 128
    %465 = vxpose.xlu0.b32.cont [8/16] 0.0, 128
    %466 = vxpose.xlu0.b32.cont [9/16] 0.0, 128
    %467 = vxpose.xlu0.b32.cont [10/16] 0.0, 128
    %468 = vxpose.xlu0.b32.cont [11/16] 0.0, 128
    %469 = vxpose.xlu0.b32.cont [12/16] 0.0, 128
    %470 = vxpose.xlu0.b32.cont [13/16] 0.0, 128
    %471 = vxpose.xlu0.b32.cont [14/16] 0.0, 128
    %472 = vxpose.xlu0.b32.cont [15/16] 0.0, 128
    %473 = vxpose.xlu0.b32.end [16/16] 0.0, 128
    %v474 = vpop.trf.xlu0
    %v475 = vpop.trf.xlu0
    %v476 = vpop.trf.xlu0
    %v477 = vpop.trf.xlu0
    %v478 = vpop.trf.xlu0
    %v479 = vpop.trf.xlu0
    %v480 = vpop.trf.xlu0
    %v481 = vpop.trf.xlu0
    %v482 = vpop.trf.xlu0
    %v483 = vpop.trf.xlu0
    %v484 = vpop.trf.xlu0
    %v485 = vpop.trf.xlu0
    %v486 = vpop.trf.xlu0
    %v487 = vpop.trf.xlu0
    %v488 = vpop.trf.xlu0
    %v489 = vpop.trf.xlu0
    %v491 = vsel %vm314, %v474, 0
    %493 = vmatprep.subr.mxu0 0.0
    %494 = vmatpush1.msra.mxu0 %v238
    %495 = vmatprep.subr.mxu0 0.0
    %496 = vmatpush1.msra.mxu0 %v243
    %497 = vmatprep.subr.mxu0 0.0
    %498 = vmatpush1.msra.mxu0 0.0
    %499 = vmatprep.subr.mxu0 0.0
    %500 = vmatpush1.msra.mxu0 0.0
    %501 = vmatprep.subr.mxu0 0.0
    %502 = vmatpush1.msra.mxu0 0.0
    %503 = vmatprep.subr.mxu0 0.0
    %504 = vmatpush1.msra.mxu0 0.0
    %505 = vmatprep.subr.mxu0 0.0
    %506 = vmatpush1.msra.mxu0 0.0
    %507 = vmatprep.subr.mxu0 0.0
    %508 = vmatpush1.msra.mxu0 0.0
    %509 = vmatprep.subr.mxu0 0.0
    %510 = vmatpush1.msra.mxu0 0.0
    %511 = vmatprep.subr.mxu0 0.0
    %512 = vmatpush1.msra.mxu0 0.0
    %513 = vmatprep.subr.mxu0 0.0
    %514 = vmatpush1.msra.mxu0 0.0
    %515 = vmatprep.subr.mxu0 0.0
    %516 = vmatpush1.msra.mxu0 0.0
    %517 = vmatprep.subr.mxu0 0.0
    %518 = vmatpush1.msra.mxu0 0.0
    %519 = vmatprep.subr.mxu0 0.0
    %520 = vmatpush1.msra.mxu0 0.0
    %521 = vmatprep.subr.mxu0 0.0
    %522 = vmatpush1.msra.mxu0 0.0
    %523 = vmatprep.subr.mxu0 0.0
    %524 = vmatpush1.msra.mxu0 0.0
    %525 = vmatprep.subr.mxu0 0.0
    %526 = vmatpush1.msra.mxu0 0.0
    %527 = vmatprep.subr.mxu0 0.0
    %528 = vmatpush1.msra.mxu0 0.0
    %529 = vmatprep.subr.mxu0 0.0
    %530 = vmatpush1.msra.mxu0 0.0
    %531 = vmatprep.subr.mxu0 0.0
    %532 = vmatpush1.msra.mxu0 0.0
    %533 = vmatprep.subr.mxu0 0.0
    %534 = vmatpush1.msra.mxu0 0.0
    %535 = vmatprep.subr.mxu0 0.0
    %536 = vmatpush1.msra.mxu0 0.0
    %537 = vmatprep.subr.mxu0 0.0
    %538 = vmatpush1.msra.mxu0 0.0
    %539 = vmatprep.subr.mxu0 0.0
    %540 = vmatpush1.msra.mxu0 0.0
    %541 = vmatprep.subr.mxu0 0.0
    %542 = vmatpush1.msra.mxu0 0.0
    %543 = vmatprep.subr.mxu0 0.0
    %544 = vmatpush1.msra.mxu0 0.0
    %545 = vmatprep.subr.mxu0 0.0
    %546 = vmatpush1.msra.mxu0 0.0
    %547 = vmatprep.subr.mxu0 0.0
    %548 = vmatpush1.msra.mxu0 0.0
    %549 = vmatprep.subr.mxu0 0.0
    %550 = vmatpush1.msra.mxu0 0.0
    %551 = vmatprep.subr.mxu0 0.0
    %552 = vmatpush1.msra.mxu0 0.0
    %553 = vmatprep.subr.mxu0 0.0
    %554 = vmatpush1.msra.mxu0 0.0
    %555 = vmatprep.subr.mxu0 0.0
    %556 = vmatpush1.msra.mxu0 0.0
    %557 = vmatprep.mubr.f32.mxu0 0.0
    %558 = vmatmul.mubr.f32.gmra.mrb[0].mxu0 %v491
    %v559 = vpop.f32.mrb[0].mxu0
    %v560 = vadd.f32 0.0, %v559
    %v561 = vpop.f32.mrb[0].mxu0
    %562 = vdwg.mxu0
    %v564 = vrot.slane %v560, 1
    %565 = vrot.lane.b32.xlu0 %v564, 32
    %v566 = vpop.permute.xlu0 %565
    %v568 = vrot.slane %v560, 2
    %569 = vrot.lane.b32.xlu0 %v568, 64
    %v570 = vpop.permute.xlu0 %569
    %v572 = vrot.slane %v560, 3
    %573 = vrot.lane.b32.xlu0 %v572, 96
    %v574 = vpop.permute.xlu0 %573
    %v576 = vrot.slane %v560, 4
    %v578 = vrot.slane %v560, 5
    %579 = vrot.lane.b32.xlu0 %v578, 32
    %v580 = vpop.permute.xlu0 %579
    %v582 = vrot.slane %v560, 6
    %583 = vrot.lane.b32.xlu0 %v582, 64
    %v584 = vpop.permute.xlu0 %583
    %v586 = vrot.slane %v560, 7
    %587 = vrot.lane.b32.xlu0 %v586, 96
    %v588 = vpop.permute.xlu0 %587
    %v590 = vsel %vm148, %v560, %v566
    %v591 = vsel %vm416, %v590, %v570
    %v592 = vsel %vm418, %v591, %v574
    %v593 = vsel %vm148, %v576, %v580
    %v594 = vsel %vm416, %v593, %v584
    %v595 = vsel %vm418, %v594, %v588
    %v598 = vrot.slane %v592, 7
    %v599 = vrot.slane %v595, 7
    %vm602 = vcmask 1040384
    %v603 = vsel %vm602, %v419, %v598
    %v604 = vsel %vm602, %v422, %v599
    %v605 = vld [vmem:[%s3] sm:$0xff]
    %v606 = vld [vmem:[%s3 + $0x8] sm:$0xff]
    %v607 = vld [vmem:[%s3 + $0x10] sm:$0xff]
    %v608 = vld [vmem:[%s3 + $0x18] sm:$0xff]
    %v609 = vld [vmem:[%s3 + $0x20] sm:$0xff]
    %v610 = vld [vmem:[%s3 + $0x28] sm:$0xff]
    %v611 = vld [vmem:[%s3 + $0x30] sm:$0xff]
    %v612 = vld [vmem:[%s3 + $0x38] sm:$0xff]
    %v613 = vld [vmem:[%s3 + $0x40] sm:$0xff]
    %v614 = vld [vmem:[%s3 + $0x48] sm:$0xff]
    %v615 = vld [vmem:[%s3 + $0x50] sm:$0xff]
    %v616 = vld [vmem:[%s3 + $0x58] sm:$0xff]
    %v617 = vld [vmem:[%s3 + $0x60] sm:$0xff]
    %v618 = vld [vmem:[%s3 + $0x68] sm:$0xff]
    %v619 = vld [vmem:[%s3 + $0x70] sm:$0xff]
    %v620 = vld [vmem:[%s3 + $0x78] sm:$0xff]
    %v621 = vld [vmem:[%s3 + $0x80] sm:$0xff]
    %v622 = vld [vmem:[%s3 + $0x88] sm:$0xff]
    %v623 = vld [vmem:[%s3 + $0x90] sm:$0xff]
    %v624 = vld [vmem:[%s3 + $0x98] sm:$0xff]
    %v625 = vld [vmem:[%s3 + $0xa0] sm:$0xff]
    %v626 = vld [vmem:[%s3 + $0xa8] sm:$0xff]
    %v627 = vld [vmem:[%s3 + $0xb0] sm:$0xff]
    %v628 = vld [vmem:[%s3 + $0xb8] sm:$0xff]
    %v629 = vld [vmem:[%s3 + $0xc0] sm:$0xff]
    %v630 = vld [vmem:[%s3 + $0xc8] sm:$0xff]
    %v631 = vld [vmem:[%s3 + $0xd0] sm:$0xff]
    %v632 = vld [vmem:[%s3 + $0xd8] sm:$0xff]
    %v633 = vld [vmem:[%s3 + $0xe0] sm:$0xff]
    %v634 = vld [vmem:[%s3 + $0xe8] sm:$0xff]
    %v635 = vld [vmem:[%s3 + $0xf0] sm:$0xff]
    %v636 = vld [vmem:[%s3 + $0xf8] sm:$0xff]
    %v637 = vlaneseq
    %v638 = vshrl.u32 %v637, 7
    %v639 = vsub.s32 2, %v638
    %v640 = vrot.slane %v28, %v639
    %641 = vmatprep.subr.mxu0 0.0
    %642 = vmatpush1.msra.mxu0 %v605
    %643 = vmatprep.subr.mxu0 0.0
    %644 = vmatpush1.msra.mxu0 %v606
    %645 = vmatprep.subr.mxu0 0.0
    %646 = vmatpush1.msra.mxu0 %v607
    %647 = vmatprep.subr.mxu0 0.0
    %648 = vmatpush1.msra.mxu0 %v608
    %649 = vmatprep.subr.mxu0 0.0
    %650 = vmatpush1.msra.mxu0 %v609
    %651 = vmatprep.subr.mxu0 0.0
    %652 = vmatpush1.msra.mxu0 %v610
    %653 = vmatprep.subr.mxu0 0.0
    %654 = vmatpush1.msra.mxu0 %v611
    %655 = vmatprep.subr.mxu0 0.0
    %656 = vmatpush1.msra.mxu0 %v612
    %657 = vmatprep.subr.mxu0 0.0
    %658 = vmatpush1.msra.mxu0 %v613
    %659 = vmatprep.subr.mxu0 0.0
    %660 = vmatpush1.msra.mxu0 %v614
    %661 = vmatprep.subr.mxu0 0.0
    %662 = vmatpush1.msra.mxu0 %v615
    %663 = vmatprep.subr.mxu0 0.0
    %664 = vmatpush1.msra.mxu0 %v616
    %665 = vmatprep.subr.mxu0 0.0
    %666 = vmatpush1.msra.mxu0 %v617
    %667 = vmatprep.subr.mxu0 0.0
    %668 = vmatpush1.msra.mxu0 %v618
    %669 = vmatprep.subr.mxu0 0.0
    %670 = vmatpush1.msra.mxu0 %v619
    %671 = vmatprep.subr.mxu0 0.0
    %672 = vmatpush1.msra.mxu0 %v620
    %673 = vmatprep.subr.mxu0 0.0
    %674 = vmatpush1.msra.mxu0 %v621
    %675 = vmatprep.subr.mxu0 0.0
    %676 = vmatpush1.msra.mxu0 %v622
    %677 = vmatprep.subr.mxu0 0.0
    %678 = vmatpush1.msra.mxu0 %v623
    %679 = vmatprep.subr.mxu0 0.0
    %680 = vmatpush1.msra.mxu0 %v624
    %681 = vmatprep.subr.mxu0 0.0
    %682 = vmatpush1.msra.mxu0 %v625
    %683 = vmatprep.subr.mxu0 0.0
    %684 = vmatpush1.msra.mxu0 %v626
    %685 = vmatprep.subr.mxu0 0.0
    %686 = vmatpush1.msra.mxu0 %v627
    %687 = vmatprep.subr.mxu0 0.0
    %688 = vmatpush1.msra.mxu0 %v628
    %689 = vmatprep.subr.mxu0 0.0
    %690 = vmatpush1.msra.mxu0 %v629
    %691 = vmatprep.subr.mxu0 0.0
    %692 = vmatpush1.msra.mxu0 %v630
    %693 = vmatprep.subr.mxu0 0.0
    %694 = vmatpush1.msra.mxu0 %v631
    %695 = vmatprep.subr.mxu0 0.0
    %696 = vmatpush1.msra.mxu0 %v632
    %697 = vmatprep.subr.mxu0 0.0
    %698 = vmatpush1.msra.mxu0 %v633
    %699 = vmatprep.subr.mxu0 0.0
    %700 = vmatpush1.msra.mxu0 %v634
    %701 = vmatprep.subr.mxu0 0.0
    %702 = vmatpush1.msra.mxu0 %v635
    %703 = vmatprep.subr.mxu0 0.0
    %704 = vmatpush1.msra.mxu0 %v636
    %705 = vmatprep.mubr.f32.mxu0 %v604
    %706 = vmatmul.mubr.f32.gmra.mrb[0].mxu0 %v603
    %v707 = vpop.f32.mrb[0].mxu0
    %v708 = vadd.f32 %v640, %v707
    %v709 = vpop.f32.mrb[0].mxu0
    %710 = vdwg.mxu0
    %v711 = vmax.f32 %v708, 0.0
    %v712 = vld [vmem:[%s4] sm:$0xff]
    %v713 = vld [vmem:[%s4 + $0x8] sm:$0xff]
    %v714 = vld [vmem:[%s4 + $0x10] sm:$0xff]
    %v715 = vld [vmem:[%s4 + $0x18] sm:$0xff]
    %v716 = vld [vmem:[%s4 + $0x20] sm:$0xff]
    %v717 = vld [vmem:[%s4 + $0x28] sm:$0xff]
    %v718 = vld [vmem:[%s4 + $0x30] sm:$0xff]
    %v719 = vld [vmem:[%s4 + $0x38] sm:$0xff]
    %v720 = vlaneseq
    %v721 = vshrl.u32 %v720, 7
    %v722 = vsub.s32 3, %v721
    %v723 = vrot.slane %v28, %v722
    %v725 = vsel %vm416, %v711, 0
    %727 = vmatprep.subr.mxu0 0.0
    %728 = vmatpush1.msra.mxu0 %v712
    %729 = vmatprep.subr.mxu0 0.0
    %730 = vmatpush1.msra.mxu0 %v713
    %731 = vmatprep.subr.mxu0 0.0
    %732 = vmatpush1.msra.mxu0 %v714
    %733 = vmatprep.subr.mxu0 0.0
    %734 = vmatpush1.msra.mxu0 %v715
    %735 = vmatprep.subr.mxu0 0.0
    %736 = vmatpush1.msra.mxu0 %v716
    %737 = vmatprep.subr.mxu0 0.0
    %738 = vmatpush1.msra.mxu0 %v717
    %739 = vmatprep.subr.mxu0 0.0
    %740 = vmatpush1.msra.mxu0 %v718
    %741 = vmatprep.subr.mxu0 0.0
    %742 = vmatpush1.msra.mxu0 %v719
    %743 = vmatprep.subr.mxu0 0.0
    %744 = vmatpush1.msra.mxu0 0.0
    %745 = vmatprep.subr.mxu0 0.0
    %746 = vmatpush1.msra.mxu0 0.0
    %747 = vmatprep.subr.mxu0 0.0
    %748 = vmatpush1.msra.mxu0 0.0
    %749 = vmatprep.subr.mxu0 0.0
    %750 = vmatpush1.msra.mxu0 0.0
    %751 = vmatprep.subr.mxu0 0.0
    %752 = vmatpush1.msra.mxu0 0.0
    %753 = vmatprep.subr.mxu0 0.0
    %754 = vmatpush1.msra.mxu0 0.0
    %755 = vmatprep.subr.mxu0 0.0
    %756 = vmatpush1.msra.mxu0 0.0
    %757 = vmatprep.subr.mxu0 0.0
    %758 = vmatpush1.msra.mxu0 0.0
    %759 = vmatprep.subr.mxu0 0.0
    %760 = vmatpush1.msra.mxu0 0.0
    %761 = vmatprep.subr.mxu0 0.0
    %762 = vmatpush1.msra.mxu0 0.0
    %763 = vmatprep.subr.mxu0 0.0
    %764 = vmatpush1.msra.mxu0 0.0
    %765 = vmatprep.subr.mxu0 0.0
    %766 = vmatpush1.msra.mxu0 0.0
    %767 = vmatprep.subr.mxu0 0.0
    %768 = vmatpush1.msra.mxu0 0.0
    %769 = vmatprep.subr.mxu0 0.0
    %770 = vmatpush1.msra.mxu0 0.0
    %771 = vmatprep.subr.mxu0 0.0
    %772 = vmatpush1.msra.mxu0 0.0
    %773 = vmatprep.subr.mxu0 0.0
    %774 = vmatpush1.msra.mxu0 0.0
    %775 = vmatprep.subr.mxu0 0.0
    %776 = vmatpush1.msra.mxu0 0.0
    %777 = vmatprep.subr.mxu0 0.0
    %778 = vmatpush1.msra.mxu0 0.0
    %779 = vmatprep.subr.mxu0 0.0
    %780 = vmatpush1.msra.mxu0 0.0
    %781 = vmatprep.subr.mxu0 0.0
    %782 = vmatpush1.msra.mxu0 0.0
    %783 = vmatprep.subr.mxu0 0.0
    %784 = vmatpush1.msra.mxu0 0.0
    %785 = vmatprep.subr.mxu0 0.0
    %786 = vmatpush1.msra.mxu0 0.0
    %787 = vmatprep.subr.mxu0 0.0
    %788 = vmatpush1.msra.mxu0 0.0
    %789 = vmatprep.subr.mxu0 0.0
    %790 = vmatpush1.msra.mxu0 0.0
    %791 = vmatprep.mubr.f32.mxu0 0.0
    %792 = vmatmul.mubr.f32.gmra.mrb[0].mxu0 %v725
    %v793 = vpop.f32.mrb[0].mxu0
    %v794 = vadd.f32 %v723, %v793
    %v795 = vpop.f32.mrb[0].mxu0
    %796 = vdwg.mxu0
    %vm797 = vcmask 123904
    %798 = vst.msk [vmem:[#allocation2] sm:$0x3] %vm797, %v794
    // Predicated region
    $region26: #{pointnet_attention_pool.1} parent=1 // pred_check
      _
    $region27: #{pointnet_attention_pool.1} parent=1 // pred_check_branch
      %800 = sbr.rel (0) target = $region29
    $region28: #{pointnet_attention_pool.1} parent=1 // pred_region
      %s802 = ssub.s32 32, 32
      %803 = vsyncadd [#allocation3], %s802
      %s805 = sshll.u32 [#allocation2], 4
      %s806 = int_to_ptr.vmem [resolvable:$true] %s805
      %808 = dma.vmem_to_hbm [thread:$0]  %s806, 32, %s6, [#allocation3]
    $region29: #{pointnet_attention_pool.1} parent=1 // pred_fallthru
      _
    // Predicated region
    $region30: #{pointnet_attention_pool.1} parent=1 // pred_check
      _
    $region31: #{pointnet_attention_pool.1} parent=1 // pred_check_branch
      %810 = sbr.rel (0) target = $region33
    $region32: #{pointnet_attention_pool.1} parent=1 // pred_region
      %811 = dma.done [#allocation3], 32
    $region33: #{pointnet_attention_pool.1} parent=1 // pred_fallthru
      _
    %812 = vsyncpa [#allocation3], 1

</llo_original>
